<compile_context>
chip_gen: v7x
topology: tpu7x:2x2x1
jax: 0.10.0
libtpu: 0.0.40
codegen_flags: <defaults>
</compile_context>

<pallas_src>
import functools

import jax
import jax.numpy as jnp
from jax.experimental import pallas as pl
from jax.experimental.pallas import tpu as pltpu

IN_FEATURES = 512
OUT_FEATURES = 512


def _round_up(x: int, m: int) -> int:
    return ((x + m - 1) // m) * m


def _linear_kernel(x_ref, w_ref, b_ref, o_ref, *, do_activation: bool):
    # MXU matmul with f32 accumulation; bias add + optional ReLU epilogue in f32.
    acc = jnp.dot(x_ref[...], w_ref[...], preferred_element_type=jnp.float32)
    acc = acc + b_ref[...].astype(jnp.float32)  # (1, N) broadcasts over rows
    if do_activation:  # static control flow, resolved at trace time
        acc = jnp.maximum(acc, 0.0)
    o_ref[...] = acc.astype(o_ref.dtype)


def linear_pallas(x, w, b, *, do_activation: bool = False,
                  block_m: int = 512, compute_dtype=None):
    """y = x @ w + b (optionally ReLU'd). x: (M, K), w: (K, N), b: (N,).

    compute_dtype: optional matmul-operand dtype (e.g. jnp.bfloat16) for
    higher MXU throughput / lower HBM traffic; accumulation stays f32.
    """
    M, K = x.shape
    Kw, N = w.shape
    assert K == Kw and b.shape == (N,)

    out_dtype = jnp.float32  # match PyTorch Linear's f32 output
    if compute_dtype is not None:
        x = x.astype(compute_dtype)
        w = w.astype(compute_dtype)
    b2 = b.astype(jnp.float32).reshape(1, N)  # keep bias/epilogue in f32

    # Tile the batch dim; keep K and N un-tiled (no K accumulator needed).
    tm = min(block_m, _round_up(M, 8))
    grid_m = pl.cdiv(M, tm)

    cost = pl.CostEstimate(
        flops=2 * M * K * N,
        transcendentals=0,
        bytes_accessed=(x.size * x.dtype.itemsize
                        + w.size * w.dtype.itemsize
                        + b2.size * b2.dtype.itemsize
                        + M * N * jnp.dtype(out_dtype).itemsize),
    )

    kernel = functools.partial(_linear_kernel, do_activation=do_activation)
    return pl.pallas_call(
        kernel,
        out_shape=jax.ShapeDtypeStruct((M, N), out_dtype),
        grid_spec=pltpu.PrefetchScalarGridSpec(
            num_scalar_prefetch=0,
            grid=(grid_m,),
            in_specs=[
                pl.BlockSpec((tm, K), lambda i: (i, 0)),   # streamed x tiles
                pl.BlockSpec((K, N), lambda i: (0, 0)),    # weight: VMEM-resident
                pl.BlockSpec((1, N), lambda i: (0, 0)),    # bias:   VMEM-resident
            ],
            out_specs=pl.BlockSpec((tm, N), lambda i: (i, 0)),
        ),
        compiler_params=pltpu.CompilerParams(
            dimension_semantics=("parallel",),  # independent batch rows
        ),
        cost_estimate=cost,
    )(x, w, b2)


class MyModulePallas:
    """Mirror of the PyTorch MyModule: Linear(512, 512) + static ReLU flag."""

    def __init__(self, do_activation: bool = False, key=None, compute_dtype=None):
        self.do_activation = do_activation
        self.compute_dtype = compute_dtype
        if key is None:
            key = jax.random.PRNGKey(0)
        kw, kb = jax.random.split(key)
        bound = 1.0 / (IN_FEATURES ** 0.5)
        # Stored as (in, out) so forward is x @ W (same math as x @ weight.T)
        self.weight = jax.random.uniform(
            kw, (IN_FEATURES, OUT_FEATURES), jnp.float32, -bound, bound
        )
        self.bias = jax.random.uniform(
            kb, (OUT_FEATURES,), jnp.float32, -bound, bound
        )

    def __call__(self, x):
        return linear_pallas(
            x, self.weight, self.bias,
            do_activation=self.do_activation,
            compute_dtype=self.compute_dtype,
        )


if __name__ == "__main__":
    key = jax.random.PRNGKey(0)
    kx, kp, kx2 = jax.random.split(key, 3)

    # --- small batch (production-like shape), f32, no activation ---
    batch = 8
    x = jax.random.normal(kx, (batch, IN_FEATURES), dtype=jnp.float32)
    module = MyModulePallas(do_activation=False, key=kp)
    y = module(x)
    jax.block_until_ready(y)
    y_ref = x @ module.weight + module.bias
    assert jnp.allclose(y, y_ref, atol=1e-4, rtol=1e-4), "mismatch vs reference"

    # --- static ReLU branch ---
    module_act = MyModulePallas(do_activation=True, key=kp)
    y_act = module_act(x)
    jax.block_until_ready(y_act)
    y_act_ref = jnp.maximum(x @ module_act.weight + module_act.bias, 0.0)
    assert jnp.allclose(y_act, y_act_ref, atol=1e-4, rtol=1e-4), "relu mismatch"

    # --- larger batch: exercises M tiling (grid > 1) and edge-block padding ---
    batch2 = 520  # not a multiple of the 512 tile -> last block is padded
    x2 = jax.random.normal(kx2, (batch2, IN_FEATURES), dtype=jnp.float32)
    y2 = module(x2)
    jax.block_until_ready(y2)
    y2_ref = x2 @ module.weight + module.bias
    assert jnp.allclose(y2, y2_ref, atol=1e-4, rtol=1e-4), "tiled mismatch"

    # --- bf16 compute path (native MXU rate on v6e/v7x), f32 accumulation ---
    module_bf16 = MyModulePallas(do_activation=False, key=kp,
                                 compute_dtype=jnp.bfloat16)
    y_bf16 = module_bf16(x2)
    jax.block_until_ready(y_bf16)
    assert jnp.allclose(y_bf16, y2_ref, atol=5e-2, rtol=5e-2), "bf16 mismatch"

    print("KERNEL_OK")
</pallas_src>

<mosaic_0001>
module attributes {stable_mosaic.version = 11 : i64} {
  func.func @_linear_kernel(%arg0: i32, %arg1: memref<8x512xf32, #tpu.memory_space<vmem>>, %arg2: memref<512x512xf32, #tpu.memory_space<vmem>>, %arg3: memref<1x512xf32, #tpu.memory_space<vmem>>, %arg4: memref<8x512xf32, #tpu.memory_space<vmem>>) attributes {dimension_semantics = [#tpu.dimension_semantics<parallel>], iteration_bounds = array<i64: 1>, scalar_prefetch = 0 : i64, scratch_operands = 0 : i64, tpu.core_type = #tpu.core_type<tc>, window_params = [{transform_indices = @transform_0, window_bounds = array<i64: 8, 512>}, {pipeline_mode = #tpu.pipeline_mode<synchronous>, transform_indices = @transform_1, window_bounds = array<i64: 512, 512>}, {pipeline_mode = #tpu.pipeline_mode<synchronous>, transform_indices = @transform_2, window_bounds = array<i64: 1, 512>}, {transform_indices = @transform_3, window_bounds = array<i64: 8, 512>}]} {
    %c0 = arith.constant 0 : index
    %c0_0 = arith.constant 0 : index
    %0 = vector.load %arg1[%c0, %c0_0] : memref<8x512xf32, #tpu.memory_space<vmem>>, vector<8x512xf32>
    %c0_1 = arith.constant 0 : index
    %c0_2 = arith.constant 0 : index
    %1 = vector.load %arg2[%c0_1, %c0_2] : memref<512x512xf32, #tpu.memory_space<vmem>>, vector<512x512xf32>
    %cst = arith.constant dense<0.000000e+00> : vector<8x512xf32>
    %2 = tpu.matmul %0, %1, %cst {dimension_numbers = #tpu.dot_dimension_numbers<[1], [0], [0], [1], [0, 0, 1, 1], [], []>} : vector<8x512xf32>, vector<512x512xf32>, vector<8x512xf32> -> vector<8x512xf32>
    %c0_3 = arith.constant 0 : index
    %c0_4 = arith.constant 0 : index
    %3 = vector.load %arg3[%c0_3, %c0_4] : memref<1x512xf32, #tpu.memory_space<vmem>>, vector<1x512xf32>
    %4 = vector.broadcast %3 : vector<1x512xf32> to vector<8x512xf32>
    %5 = arith.addf %2, %4 : vector<8x512xf32>
    %c0_5 = arith.constant 0 : index
    %c0_6 = arith.constant 0 : index
    %6 = vector.load %arg4[%c0_5, %c0_6] : memref<8x512xf32, #tpu.memory_space<vmem>>, vector<8x512xf32>
    tpu.vector_store %arg4[%c0_5, %c0_6], %5 {strides = array<i32>} : memref<8x512xf32, #tpu.memory_space<vmem>>, vector<8x512xf32>,
    return
  }
  func.func @transform_0(%arg0: i32) -> (i32, i32) {
    %c0_i32 = arith.constant 0 : i32
    %c0_i32_0 = arith.constant 0 : i32
    return %arg0, %c0_i32 : i32, i32
  }
  func.func @transform_1(%arg0: i32) -> (i32, i32) {
    %c0_i32 = arith.constant 0 : i32
    %c0_i32_0 = arith.constant 0 : i32
    %c0_i32_1 = arith.constant 0 : i32
    return %c0_i32, %c0_i32_0 : i32, i32
  }
  func.func @transform_2(%arg0: i32) -> (i32, i32) {
    %c0_i32 = arith.constant 0 : i32
    %c0_i32_0 = arith.constant 0 : i32
    %c0_i32_1 = arith.constant 0 : i32
    return %c0_i32, %c0_i32_0 : i32, i32
  }
  func.func @transform_3(%arg0: i32) -> (i32, i32) {
    %c0_i32 = arith.constant 0 : i32
    %c0_i32_0 = arith.constant 0 : i32
    return %arg0, %c0_i32 : i32, i32
  }
}

</mosaic_0001>

<llo_original>
// kernel: tpu_custom_call.1
$region0: #{tpu_custom_call.1}
  #allocation0 [shape = 'u32[]', space=smem, size = 0x4, offset = 0x4, fixed_abs, tag = 'smem constant byte address 0x4 - core index']
  #allocation1 [shape = 'u32[144,128]{1,0:T(1,128)}', space=vmem, size = 0x12000, scoped, tag = 'internal scratch']
  %s0 = inlined_call_operand.hbm [shape: f32[8,512], index: 0, kind: input, shape index: {}]
  %s1 = inlined_call_operand.hbm [shape: f32[512,512], index: 1, kind: input, shape index: {}]
  %s2 = inlined_call_operand.vmem [shape: f32[1,512], index: 2, kind: input, shape index: {}]
  %s3 = inlined_call_operand.hbm [shape: f32[8,512], index: 3, kind: output, shape index: {}]
  %s4 = sld [smem:[#allocation0]]
  $region30: #{tpu_custom_call.1} parent=0
    _
  %s6 = ssub.s32 1, %s4
  %s7 = scalar_select 0, %s6, %s4
  $region1: #{tpu_custom_call.1} parent=0
    #allocation2 [shape = 'u8[16384]{0}', space=vmem, size = 0x4000, scoped, tag = 'input window, operand 0, single buffered']
    #allocation3 [shape = 's32[1]{0}', space=sflag, size = 0x4, scoped, tag = 'scoped memory for tpu_custom_call.1']
    #allocation4 [shape = 's32[1]{0}', space=sflag, size = 0x4, scoped, tag = 'scoped memory for tpu_custom_call.1']
    #allocation5 [shape = 'u8[1048576]{0}', space=vmem, size = 0x100000, scoped, tag = 'input window, operand 1, single buffered']
    #allocation6 [shape = 's32[1]{0}', space=sflag, size = 0x4, scoped, tag = 'scoped memory for tpu_custom_call.1']
    #allocation7 [shape = 'u8[16384]{0}', space=vmem, size = 0x4000, scoped, tag = 'output window, operand 0, single buffered']
    %8 = vsyncpa [#allocation3], 0
    %9 = vsyncpa [#allocation6], 0
    %10 = vsyncpa [#allocation4], 0
    // Predicated region
    $region2: #{tpu_custom_call.1} parent=1 // pred_check
      _
    $region3: #{tpu_custom_call.1} parent=1 // pred_check_branch
      %12 = sbr.rel (0) target = $region5
    $region4: #{tpu_custom_call.1} parent=1 // pred_region
      %s14 = ssub.s32 512, 512
      %15 = vsyncadd [#allocation3], %s14
      %s17 = sshll.u32 [#allocation2], 4
      %s18 = int_to_ptr.vmem [resolvable:$true] %s17
      %20 = dma.hbm_to_vmem [thread:$0]  %s0, 512, %s18, [#allocation3]
    $region5: #{tpu_custom_call.1} parent=1 // pred_fallthru
      _
    // Predicated region
    $region6: #{tpu_custom_call.1} parent=1 // pred_check
      _
    $region7: #{tpu_custom_call.1} parent=1 // pred_check_branch
      %22 = sbr.rel (0) target = $region9
    $region8: #{tpu_custom_call.1} parent=1 // pred_region
      %s24 = ssub.s32 32768, 32768
      %25 = vsyncadd [#allocation6], %s24
      %s26 = sshll.u32 [#allocation5], 4
      %s27 = int_to_ptr.vmem [resolvable:$true] %s26
      %32 = dma.hbm_to_vmem [thread:$0]  %s1, 32768, %s27, [#allocation6], 512, 512, 32
    $region9: #{tpu_custom_call.1} parent=1 // pred_fallthru
      _
    // Predicated region
    $region10: #{tpu_custom_call.1} parent=1 // pred_check
      _
    $region11: #{tpu_custom_call.1} parent=1 // pred_check_branch
      %34 = sbr.rel (0) target = $region13
    $region12: #{tpu_custom_call.1} parent=1 // pred_region
      _
    $region13: #{tpu_custom_call.1} parent=1 // pred_fallthru
      _
    // Predicated region
    $region14: #{tpu_custom_call.1} parent=1 // pred_check
      _
    $region15: #{tpu_custom_call.1} parent=1 // pred_check_branch
      %36 = sbr.rel (0) target = $region17
    $region16: #{tpu_custom_call.1} parent=1 // pred_region
      %37 = dma.done [#allocation3], 512
    $region17: #{tpu_custom_call.1} parent=1 // pred_fallthru
      _
    // Predicated region
    $region18: #{tpu_custom_call.1} parent=1 // pred_check
      _
    $region19: #{tpu_custom_call.1} parent=1 // pred_check_branch
      %39 = sbr.rel (0) target = $region21
    $region20: #{tpu_custom_call.1} parent=1 // pred_region
      %40 = dma.done [#allocation6], 32768
    $region21: #{tpu_custom_call.1} parent=1 // pred_fallthru
      _
    %v41 = vld [vmem:[#allocation2] sm:$0xff]
    %v42 = vld [vmem:[#allocation2 + $0x8] sm:$0xff]
    %v43 = vld [vmem:[#allocation2 + $0x10] sm:$0xff]
    %v44 = vld [vmem:[#allocation2 + $0x18] sm:$0xff]
    %v45 = vld [vmem:[#allocation5] sm:$0xff]
    %v46 = vld [vmem:[#allocation5 + $0x8] sm:$0xff]
    %v47 = vld [vmem:[#allocation5 + $0x10] sm:$0xff]
    %v48 = vld [vmem:[#allocation5 + $0x18] sm:$0xff]
    %v49 = vld [vmem:[#allocation5 + $0x20] sm:$0xff]
    %v50 = vld [vmem:[#allocation5 + $0x28] sm:$0xff]
    %v51 = vld [vmem:[#allocation5 + $0x30] sm:$0xff]
    %v52 = vld [vmem:[#allocation5 + $0x38] sm:$0xff]
    %v53 = vld [vmem:[#allocation5 + $0x40] sm:$0xff]
    %v54 = vld [vmem:[#allocation5 + $0x48] sm:$0xff]
    %v55 = vld [vmem:[#allocation5 + $0x50] sm:$0xff]
    %v56 = vld [vmem:[#allocation5 + $0x58] sm:$0xff]
    %v57 = vld [vmem:[#allocation5 + $0x60] sm:$0xff]
    %v58 = vld [vmem:[#allocation5 + $0x68] sm:$0xff]
    %v59 = vld [vmem:[#allocation5 + $0x70] sm:$0xff]
    %v60 = vld [vmem:[#allocation5 + $0x78] sm:$0xff]
    %v61 = vld [vmem:[#allocation5 + $0x80] sm:$0xff]
    %v62 = vld [vmem:[#allocation5 + $0x88] sm:$0xff]
    %v63 = vld [vmem:[#allocation5 + $0x90] sm:$0xff]
    %v64 = vld [vmem:[#allocation5 + $0x98] sm:$0xff]
    %v65 = vld [vmem:[#allocation5 + $0xa0] sm:$0xff]
    %v66 = vld [vmem:[#allocation5 + $0xa8] sm:$0xff]
    %v67 = vld [vmem:[#allocation5 + $0xb0] sm:$0xff]
    %v68 = vld [vmem:[#allocation5 + $0xb8] sm:$0xff]
    %v69 = vld [vmem:[#allocation5 + $0xc0] sm:$0xff]
    %v70 = vld [vmem:[#allocation5 + $0xc8] sm:$0xff]
    %v71 = vld [vmem:[#allocation5 + $0xd0] sm:$0xff]
    %v72 = vld [vmem:[#allocation5 + $0xd8] sm:$0xff]
    %v73 = vld [vmem:[#allocation5 + $0xe0] sm:$0xff]
    %v74 = vld [vmem:[#allocation5 + $0xe8] sm:$0xff]
    %v75 = vld [vmem:[#allocation5 + $0xf0] sm:$0xff]
    %v76 = vld [vmem:[#allocation5 + $0xf8] sm:$0xff]
    %v77 = vld [vmem:[#allocation5 + $0x100] sm:$0xff]
    %v78 = vld [vmem:[#allocation5 + $0x108] sm:$0xff]
    %v79 = vld [vmem:[#allocation5 + $0x110] sm:$0xff]
    %v80 = vld [vmem:[#allocation5 + $0x118] sm:$0xff]
    %v81 = vld [vmem:[#allocation5 + $0x120] sm:$0xff]
    %v82 = vld [vmem:[#allocation5 + $0x128] sm:$0xff]
    %v83 = vld [vmem:[#allocation5 + $0x130] sm:$0xff]
    %v84 = vld [vmem:[#allocation5 + $0x138] sm:$0xff]
    %v85 = vld [vmem:[#allocation5 + $0x140] sm:$0xff]
    %v86 = vld [vmem:[#allocation5 + $0x148] sm:$0xff]
    %v87 = vld [vmem:[#allocation5 + $0x150] sm:$0xff]
    %v88 = vld [vmem:[#allocation5 + $0x158] sm:$0xff]
    %v89 = vld [vmem:[#allocation5 + $0x160] sm:$0xff]
    %v90 = vld [vmem:[#allocation5 + $0x168] sm:$0xff]
    %v91 = vld [vmem:[#allocation5 + $0x170] sm:$0xff]
    %v92 = vld [vmem:[#allocation5 + $0x178] sm:$0xff]
    %v93 = vld [vmem:[#allocation5 + $0x180] sm:$0xff]
    %v94 = vld [vmem:[#allocation5 + $0x188] sm:$0xff]
    %v95 = vld [vmem:[#allocation5 + $0x190] sm:$0xff]
    %v96 = vld [vmem:[#allocation5 + $0x198] sm:$0xff]
    %v97 = vld [vmem:[#allocation5 + $0x1a0] sm:$0xff]
    %v98 = vld [vmem:[#allocation5 + $0x1a8] sm:$0xff]
    %v99 = vld [vmem:[#allocation5 + $0x1b0] sm:$0xff]
    %v100 = vld [vmem:[#allocation5 + $0x1b8] sm:$0xff]
    %v101 = vld [vmem:[#allocation5 + $0x1c0] sm:$0xff]
    %v102 = vld [vmem:[#allocation5 + $0x1c8] sm:$0xff]
    %v103 = vld [vmem:[#allocation5 + $0x1d0] sm:$0xff]
    %v104 = vld [vmem:[#allocation5 + $0x1d8] sm:$0xff]
    %v105 = vld [vmem:[#allocation5 + $0x1e0] sm:$0xff]
    %v106 = vld [vmem:[#allocation5 + $0x1e8] sm:$0xff]
    %v107 = vld [vmem:[#allocation5 + $0x1f0] sm:$0xff]
    %v108 = vld [vmem:[#allocation5 + $0x1f8] sm:$0xff]
    %v109 = vld [vmem:[#allocation5 + $0x200] sm:$0xff]
    %v110 = vld [vmem:[#allocation5 + $0x208] sm:$0xff]
    %v111 = vld [vmem:[#allocation5 + $0x210] sm:$0xff]
    %v112 = vld [vmem:[#allocation5 + $0x218] sm:$0xff]
    %v113 = vld [vmem:[#allocation5 + $0x220] sm:$0xff]
    %v114 = vld [vmem:[#allocation5 + $0x228] sm:$0xff]
    %v115 = vld [vmem:[#allocation5 + $0x230] sm:$0xff]
    %v116 = vld [vmem:[#allocation5 + $0x238] sm:$0xff]
    %v117 = vld [vmem:[#allocation5 + $0x240] sm:$0xff]
    %v118 = vld [vmem:[#allocation5 + $0x248] sm:$0xff]
    %v119 = vld [vmem:[#allocation5 + $0x250] sm:$0xff]
    %v120 = vld [vmem:[#allocation5 + $0x258] sm:$0xff]
    %v121 = vld [vmem:[#allocation5 + $0x260] sm:$0xff]
    %v122 = vld [vmem:[#allocation5 + $0x268] sm:$0xff]
    %v123 = vld [vmem:[#allocation5 + $0x270] sm:$0xff]
    %v124 = vld [vmem:[#allocation5 + $0x278] sm:$0xff]
    %v125 = vld [vmem:[#allocation5 + $0x280] sm:$0xff]
    %v126 = vld [vmem:[#allocation5 + $0x288] sm:$0xff]
    %v127 = vld [vmem:[#allocation5 + $0x290] sm:$0xff]
    %v128 = vld [vmem:[#allocation5 + $0x298] sm:$0xff]
    %v129 = vld [vmem:[#allocation5 + $0x2a0] sm:$0xff]
    %v130 = vld [vmem:[#allocation5 + $0x2a8] sm:$0xff]
    %v131 = vld [vmem:[#allocation5 + $0x2b0] sm:$0xff]
    %v132 = vld [vmem:[#allocation5 + $0x2b8] sm:$0xff]
    %v133 = vld [vmem:[#allocation5 + $0x2c0] sm:$0xff]
    %v134 = vld [vmem:[#allocation5 + $0x2c8] sm:$0xff]
    %v135 = vld [vmem:[#allocation5 + $0x2d0] sm:$0xff]
    %v136 = vld [vmem:[#allocation5 + $0x2d8] sm:$0xff]
    %v137 = vld [vmem:[#allocation5 + $0x2e0] sm:$0xff]
    %v138 = vld [vmem:[#allocation5 + $0x2e8] sm:$0xff]
    %v139 = vld [vmem:[#allocation5 + $0x2f0] sm:$0xff]
    %v140 = vld [vmem:[#allocation5 + $0x2f8] sm:$0xff]
    %v141 = vld [vmem:[#allocation5 + $0x300] sm:$0xff]
    %v142 = vld [vmem:[#allocation5 + $0x308] sm:$0xff]
    %v143 = vld [vmem:[#allocation5 + $0x310] sm:$0xff]
    %v144 = vld [vmem:[#allocation5 + $0x318] sm:$0xff]
    %v145 = vld [vmem:[#allocation5 + $0x320] sm:$0xff]
    %v146 = vld [vmem:[#allocation5 + $0x328] sm:$0xff]
    %v147 = vld [vmem:[#allocation5 + $0x330] sm:$0xff]
    %v148 = vld [vmem:[#allocation5 + $0x338] sm:$0xff]
    %v149 = vld [vmem:[#allocation5 + $0x340] sm:$0xff]
    %v150 = vld [vmem:[#allocation5 + $0x348] sm:$0xff]
    %v151 = vld [vmem:[#allocation5 + $0x350] sm:$0xff]
    %v152 = vld [vmem:[#allocation5 + $0x358] sm:$0xff]
    %v153 = vld [vmem:[#allocation5 + $0x360] sm:$0xff]
    %v154 = vld [vmem:[#allocation5 + $0x368] sm:$0xff]
    %v155 = vld [vmem:[#allocation5 + $0x370] sm:$0xff]
    %v156 = vld [vmem:[#allocation5 + $0x378] sm:$0xff]
    %v157 = vld [vmem:[#allocation5 + $0x380] sm:$0xff]
    %v158 = vld [vmem:[#allocation5 + $0x388] sm:$0xff]
    %v159 = vld [vmem:[#allocation5 + $0x390] sm:$0xff]
    %v160 = vld [vmem:[#allocation5 + $0x398] sm:$0xff]
    %v161 = vld [vmem:[#allocation5 + $0x3a0] sm:$0xff]
    %v162 = vld [vmem:[#allocation5 + $0x3a8] sm:$0xff]
    %v163 = vld [vmem:[#allocation5 + $0x3b0] sm:$0xff]
    %v164 = vld [vmem:[#allocation5 + $0x3b8] sm:$0xff]
    %v165 = vld [vmem:[#allocation5 + $0x3c0] sm:$0xff]
    %v166 = vld [vmem:[#allocation5 + $0x3c8] sm:$0xff]
    %v167 = vld [vmem:[#allocation5 + $0x3d0] sm:$0xff]
    %v168 = vld [vmem:[#allocation5 + $0x3d8] sm:$0xff]
    %v169 = vld [vmem:[#allocation5 + $0x3e0] sm:$0xff]
    %v170 = vld [vmem:[#allocation5 + $0x3e8] sm:$0xff]
    %v171 = vld [vmem:[#allocation5 + $0x3f0] sm:$0xff]
    %v172 = vld [vmem:[#allocation5 + $0x3f8] sm:$0xff]
    %v173 = vld [vmem:[#allocation5 + $0x400] sm:$0xff]
    %v174 = vld [vmem:[#allocation5 + $0x408] sm:$0xff]
    %v175 = vld [vmem:[#allocation5 + $0x410] sm:$0xff]
    %v176 = vld [vmem:[#allocation5 + $0x418] sm:$0xff]
    %v177 = vld [vmem:[#allocation5 + $0x420] sm:$0xff]
    %v178 = vld [vmem:[#allocation5 + $0x428] sm:$0xff]
    %v179 = vld [vmem:[#allocation5 + $0x430] sm:$0xff]
    %v180 = vld [vmem:[#allocation5 + $0x438] sm:$0xff]
    %v181 = vld [vmem:[#allocation5 + $0x440] sm:$0xff]
    %v182 = vld [vmem:[#allocation5 + $0x448] sm:$0xff]
    %v183 = vld [vmem:[#allocation5 + $0x450] sm:$0xff]
    %v184 = vld [vmem:[#allocation5 + $0x458] sm:$0xff]
    %v185 = vld [vmem:[#allocation5 + $0x460] sm:$0xff]
    %v186 = vld [vmem:[#allocation5 + $0x468] sm:$0xff]
    %v187 = vld [vmem:[#allocation5 + $0x470] sm:$0xff]
    %v188 = vld [vmem:[#allocation5 + $0x478] sm:$0xff]
    %v189 = vld [vmem:[#allocation5 + $0x480] sm:$0xff]
    %v190 = vld [vmem:[#allocation5 + $0x488] sm:$0xff]
    %v191 = vld [vmem:[#allocation5 + $0x490] sm:$0xff]
    %v192 = vld [vmem:[#allocation5 + $0x498] sm:$0xff]
    %v193 = vld [vmem:[#allocation5 + $0x4a0] sm:$0xff]
    %v194 = vld [vmem:[#allocation5 + $0x4a8] sm:$0xff]
    %v195 = vld [vmem:[#allocation5 + $0x4b0] sm:$0xff]
    %v196 = vld [vmem:[#allocation5 + $0x4b8] sm:$0xff]
    %v197 = vld [vmem:[#allocation5 + $0x4c0] sm:$0xff]
    %v198 = vld [vmem:[#allocation5 + $0x4c8] sm:$0xff]
    %v199 = vld [vmem:[#allocation5 + $0x4d0] sm:$0xff]
    %v200 = vld [vmem:[#allocation5 + $0x4d8] sm:$0xff]
    %v201 = vld [vmem:[#allocation5 + $0x4e0] sm:$0xff]
    %v202 = vld [vmem:[#allocation5 + $0x4e8] sm:$0xff]
    %v203 = vld [vmem:[#allocation5 + $0x4f0] sm:$0xff]
    %v204 = vld [vmem:[#allocation5 + $0x4f8] sm:$0xff]
    %v205 = vld [vmem:[#allocation5 + $0x500] sm:$0xff]
    %v206 = vld [vmem:[#allocation5 + $0x508] sm:$0xff]
    %v207 = vld [vmem:[#allocation5 + $0x510] sm:$0xff]
    %v208 = vld [vmem:[#allocation5 + $0x518] sm:$0xff]
    %v209 = vld [vmem:[#allocation5 + $0x520] sm:$0xff]
    %v210 = vld [vmem:[#allocation5 + $0x528] sm:$0xff]
    %v211 = vld [vmem:[#allocation5 + $0x530] sm:$0xff]
    %v212 = vld [vmem:[#allocation5 + $0x538] sm:$0xff]
    %v213 = vld [vmem:[#allocation5 + $0x540] sm:$0xff]
    %v214 = vld [vmem:[#allocation5 + $0x548] sm:$0xff]
    %v215 = vld [vmem:[#allocation5 + $0x550] sm:$0xff]
    %v216 = vld [vmem:[#allocation5 + $0x558] sm:$0xff]
    %v217 = vld [vmem:[#allocation5 + $0x560] sm:$0xff]
    %v218 = vld [vmem:[#allocation5 + $0x568] sm:$0xff]
    %v219 = vld [vmem:[#allocation5 + $0x570] sm:$0xff]
    %v220 = vld [vmem:[#allocation5 + $0x578] sm:$0xff]
    %v221 = vld [vmem:[#allocation5 + $0x580] sm:$0xff]
    %v222 = vld [vmem:[#allocation5 + $0x588] sm:$0xff]
    %v223 = vld [vmem:[#allocation5 + $0x590] sm:$0xff]
    %v224 = vld [vmem:[#allocation5 + $0x598] sm:$0xff]
    %v225 = vld [vmem:[#allocation5 + $0x5a0] sm:$0xff]
    %v226 = vld [vmem:[#allocation5 + $0x5a8] sm:$0xff]
    %v227 = vld [vmem:[#allocation5 + $0x5b0] sm:$0xff]
    %v228 = vld [vmem:[#allocation5 + $0x5b8] sm:$0xff]
    %v229 = vld [vmem:[#allocation5 + $0x5c0] sm:$0xff]
    %v230 = vld [vmem:[#allocation5 + $0x5c8] sm:$0xff]
    %v231 = vld [vmem:[#allocation5 + $0x5d0] sm:$0xff]
    %v232 = vld [vmem:[#allocation5 + $0x5d8] sm:$0xff]
    %v233 = vld [vmem:[#allocation5 + $0x5e0] sm:$0xff]
    %v234 = vld [vmem:[#allocation5 + $0x5e8] sm:$0xff]
    %v235 = vld [vmem:[#allocation5 + $0x5f0] sm:$0xff]
    %v236 = vld [vmem:[#allocation5 + $0x5f8] sm:$0xff]
    %v237 = vld [vmem:[#allocation5 + $0x600] sm:$0xff]
    %v238 = vld [vmem:[#allocation5 + $0x608] sm:$0xff]
    %v239 = vld [vmem:[#allocation5 + $0x610] sm:$0xff]
    %v240 = vld [vmem:[#allocation5 + $0x618] sm:$0xff]
    %v241 = vld [vmem:[#allocation5 + $0x620] sm:$0xff]
    %v242 = vld [vmem:[#allocation5 + $0x628] sm:$0xff]
    %v243 = vld [vmem:[#allocation5 + $0x630] sm:$0xff]
    %v244 = vld [vmem:[#allocation5 + $0x638] sm:$0xff]
    %v245 = vld [vmem:[#allocation5 + $0x640] sm:$0xff]
    %v246 = vld [vmem:[#allocation5 + $0x648] sm:$0xff]
    %v247 = vld [vmem:[#allocation5 + $0x650] sm:$0xff]
    %v248 = vld [vmem:[#allocation5 + $0x658] sm:$0xff]
    %v249 = vld [vmem:[#allocation5 + $0x660] sm:$0xff]
    %v250 = vld [vmem:[#allocation5 + $0x668] sm:$0xff]
    %v251 = vld [vmem:[#allocation5 + $0x670] sm:$0xff]
    %v252 = vld [vmem:[#allocation5 + $0x678] sm:$0xff]
    %v253 = vld [vmem:[#allocation5 + $0x680] sm:$0xff]
    %v254 = vld [vmem:[#allocation5 + $0x688] sm:$0xff]
    %v255 = vld [vmem:[#allocation5 + $0x690] sm:$0xff]
    %v256 = vld [vmem:[#allocation5 + $0x698] sm:$0xff]
    %v257 = vld [vmem:[#allocation5 + $0x6a0] sm:$0xff]
    %v258 = vld [vmem:[#allocation5 + $0x6a8] sm:$0xff]
    %v259 = vld [vmem:[#allocation5 + $0x6b0] sm:$0xff]
    %v260 = vld [vmem:[#allocation5 + $0x6b8] sm:$0xff]
    %v261 = vld [vmem:[#allocation5 + $0x6c0] sm:$0xff]
    %v262 = vld [vmem:[#allocation5 + $0x6c8] sm:$0xff]
    %v263 = vld [vmem:[#allocation5 + $0x6d0] sm:$0xff]
    %v264 = vld [vmem:[#allocation5 + $0x6d8] sm:$0xff]
    %v265 = vld [vmem:[#allocation5 + $0x6e0] sm:$0xff]
    %v266 = vld [vmem:[#allocation5 + $0x6e8] sm:$0xff]
    %v267 = vld [vmem:[#allocation5 + $0x6f0] sm:$0xff]
    %v268 = vld [vmem:[#allocation5 + $0x6f8] sm:$0xff]
    %v269 = vld [vmem:[#allocation5 + $0x700] sm:$0xff]
    %v270 = vld [vmem:[#allocation5 + $0x708] sm:$0xff]
    %v271 = vld [vmem:[#allocation5 + $0x710] sm:$0xff]
    %v272 = vld [vmem:[#allocation5 + $0x718] sm:$0xff]
    %v273 = vld [vmem:[#allocation5 + $0x720] sm:$0xff]
    %v274 = vld [vmem:[#allocation5 + $0x728] sm:$0xff]
    %v275 = vld [vmem:[#allocation5 + $0x730] sm:$0xff]
    %v276 = vld [vmem:[#allocation5 + $0x738] sm:$0xff]
    %v277 = vld [vmem:[#allocation5 + $0x740] sm:$0xff]
    %v278 = vld [vmem:[#allocation5 + $0x748] sm:$0xff]
    %v279 = vld [vmem:[#allocation5 + $0x750] sm:$0xff]
    %v280 = vld [vmem:[#allocation5 + $0x758] sm:$0xff]
    %v281 = vld [vmem:[#allocation5 + $0x760] sm:$0xff]
    %v282 = vld [vmem:[#allocation5 + $0x768] sm:$0xff]
    %v283 = vld [vmem:[#allocation5 + $0x770] sm:$0xff]
    %v284 = vld [vmem:[#allocation5 + $0x778] sm:$0xff]
    %v285 = vld [vmem:[#allocation5 + $0x780] sm:$0xff]
    %v286 = vld [vmem:[#allocation5 + $0x788] sm:$0xff]
    %v287 = vld [vmem:[#allocation5 + $0x790] sm:$0xff]
    %v288 = vld [vmem:[#allocation5 + $0x798] sm:$0xff]
    %v289 = vld [vmem:[#allocation5 + $0x7a0] sm:$0xff]
    %v290 = vld [vmem:[#allocation5 + $0x7a8] sm:$0xff]
    %v291 = vld [vmem:[#allocation5 + $0x7b0] sm:$0xff]
    %v292 = vld [vmem:[#allocation5 + $0x7b8] sm:$0xff]
    %v293 = vld [vmem:[#allocation5 + $0x7c0] sm:$0xff]
    %v294 = vld [vmem:[#allocation5 + $0x7c8] sm:$0xff]
    %v295 = vld [vmem:[#allocation5 + $0x7d0] sm:$0xff]
    %v296 = vld [vmem:[#allocation5 + $0x7d8] sm:$0xff]
    %v297 = vld [vmem:[#allocation5 + $0x7e0] sm:$0xff]
    %v298 = vld [vmem:[#allocation5 + $0x7e8] sm:$0xff]
    %v299 = vld [vmem:[#allocation5 + $0x7f0] sm:$0xff]
    %v300 = vld [vmem:[#allocation5 + $0x7f8] sm:$0xff]
    %v301 = vld [vmem:[%s2] sm:$0xf]
    %v303 = vlaneseq
    %v304 = vshrl.u32 %v303, 7
    %v305 = vsub.s32 0, %v304
    %v306 = vrot.slane %v301, %v305
    %v307 = vlaneseq
    %v308 = vshrl.u32 %v307, 7
    %v309 = vsub.s32 1, %v308
    %v310 = vrot.slane %v301, %v309
    %v311 = vlaneseq
    %v312 = vshrl.u32 %v311, 7
    %v313 = vsub.s32 2, %v312
    %v314 = vrot.slane %v301, %v313
    %v315 = vlaneseq
    %v316 = vshrl.u32 %v315, 7
    %v317 = vsub.s32 3, %v316
    %v318 = vrot.slane %v301, %v317
    %323 = vmatprep.subr.mxu0 %v46
    %324 = vmatpush1.msra.mxu0 %v45
    %325 = vmatprep.subr.mxu0 %v50
    %326 = vmatpush1.msra.mxu0 %v49
    %327 = vmatprep.subr.mxu0 %v54
    %328 = vmatpush1.msra.mxu0 %v53
    %329 = vmatprep.subr.mxu0 %v58
    %330 = vmatpush1.msra.mxu0 %v57
    %331 = vmatprep.subr.mxu0 %v62
    %332 = vmatpush1.msra.mxu0 %v61
    %333 = vmatprep.subr.mxu0 %v66
    %334 = vmatpush1.msra.mxu0 %v65
    %335 = vmatprep.subr.mxu0 %v70
    %336 = vmatpush1.msra.mxu0 %v69
    %337 = vmatprep.subr.mxu0 %v74
    %338 = vmatpush1.msra.mxu0 %v73
    %339 = vmatprep.subr.mxu0 %v78
    %340 = vmatpush1.msra.mxu0 %v77
    %341 = vmatprep.subr.mxu0 %v82
    %342 = vmatpush1.msra.mxu0 %v81
    %343 = vmatprep.subr.mxu0 %v86
    %344 = vmatpush1.msra.mxu0 %v85
    %345 = vmatprep.subr.mxu0 %v90
    %346 = vmatpush1.msra.mxu0 %v89
    %347 = vmatprep.subr.mxu0 %v94
    %348 = vmatpush1.msra.mxu0 %v93
    %349 = vmatprep.subr.mxu0 %v98
    %350 = vmatpush1.msra.mxu0 %v97
    %351 = vmatprep.subr.mxu0 %v102
    %352 = vmatpush1.msra.mxu0 %v101
    %353 = vmatprep.subr.mxu0 %v106
    %354 = vmatpush1.msra.mxu0 %v105
    %355 = vmatprep.subr.mxu0 %v110
    %356 = vmatpush1.msra.mxu0 %v109
    %357 = vmatprep.subr.mxu0 %v114
    %358 = vmatpush1.msra.mxu0 %v113
    %359 = vmatprep.subr.mxu0 %v118
    %360 = vmatpush1.msra.mxu0 %v117
    %361 = vmatprep.subr.mxu0 %v122
    %362 = vmatpush1.msra.mxu0 %v121
    %363 = vmatprep.subr.mxu0 %v126
    %364 = vmatpush1.msra.mxu0 %v125
    %365 = vmatprep.subr.mxu0 %v130
    %366 = vmatpush1.msra.mxu0 %v129
    %367 = vmatprep.subr.mxu0 %v134
    %368 = vmatpush1.msra.mxu0 %v133
    %369 = vmatprep.subr.mxu0 %v138
    %370 = vmatpush1.msra.mxu0 %v137
    %371 = vmatprep.subr.mxu0 %v142
    %372 = vmatpush1.msra.mxu0 %v141
    %373 = vmatprep.subr.mxu0 %v146
    %374 = vmatpush1.msra.mxu0 %v145
    %375 = vmatprep.subr.mxu0 %v150
    %376 = vmatpush1.msra.mxu0 %v149
    %377 = vmatprep.subr.mxu0 %v154
    %378 = vmatpush1.msra.mxu0 %v153
    %379 = vmatprep.subr.mxu0 %v158
    %380 = vmatpush1.msra.mxu0 %v157
    %381 = vmatprep.subr.mxu0 %v162
    %382 = vmatpush1.msra.mxu0 %v161
    %383 = vmatprep.subr.mxu0 %v166
    %384 = vmatpush1.msra.mxu0 %v165
    %385 = vmatprep.subr.mxu0 %v170
    %386 = vmatpush1.msra.mxu0 %v169
    %387 = vmatprep.mubr.f32.mxu0 %v42
    %388 = vmatmul.mubr.f32.gmra.mrb[0].mxu0 %v41
    %v389 = vpop.f32.mrb[0].mxu0
    %v390 = vadd.f32 %v306, %v389
    %v391 = vpop.f32.mrb[0].mxu0
    %v392 = vadd.f32 %v310, %v391
    %393 = vdwg.mxu0
    %394 = vmatprep.subr.mxu0 %v174
    %395 = vmatpush1.msra.mxu0 %v173
    %396 = vmatprep.subr.mxu0 %v178
    %397 = vmatpush1.msra.mxu0 %v177
    %398 = vmatprep.subr.mxu0 %v182
    %399 = vmatpush1.msra.mxu0 %v181
    %400 = vmatprep.subr.mxu0 %v186
    %401 = vmatpush1.msra.mxu0 %v185
    %402 = vmatprep.subr.mxu0 %v190
    %403 = vmatpush1.msra.mxu0 %v189
    %404 = vmatprep.subr.mxu0 %v194
    %405 = vmatpush1.msra.mxu0 %v193
    %406 = vmatprep.subr.mxu0 %v198
    %407 = vmatpush1.msra.mxu0 %v197
    %408 = vmatprep.subr.mxu0 %v202
    %409 = vmatpush1.msra.mxu0 %v201
    %410 = vmatprep.subr.mxu0 %v206
    %411 = vmatpush1.msra.mxu0 %v205
    %412 = vmatprep.subr.mxu0 %v210
    %413 = vmatpush1.msra.mxu0 %v209
    %414 = vmatprep.subr.mxu0 %v214
    %415 = vmatpush1.msra.mxu0 %v213
    %416 = vmatprep.subr.mxu0 %v218
    %417 = vmatpush1.msra.mxu0 %v217
    %418 = vmatprep.subr.mxu0 %v222
    %419 = vmatpush1.msra.mxu0 %v221
    %420 = vmatprep.subr.mxu0 %v226
    %421 = vmatpush1.msra.mxu0 %v225
    %422 = vmatprep.subr.mxu0 %v230
    %423 = vmatpush1.msra.mxu0 %v229
    %424 = vmatprep.subr.mxu0 %v234
    %425 = vmatpush1.msra.mxu0 %v233
    %426 = vmatprep.subr.mxu0 %v238
    %427 = vmatpush1.msra.mxu0 %v237
    %428 = vmatprep.subr.mxu0 %v242
    %429 = vmatpush1.msra.mxu0 %v241
    %430 = vmatprep.subr.mxu0 %v246
    %431 = vmatpush1.msra.mxu0 %v245
    %432 = vmatprep.subr.mxu0 %v250
    %433 = vmatpush1.msra.mxu0 %v249
    %434 = vmatprep.subr.mxu0 %v254
    %435 = vmatpush1.msra.mxu0 %v253
    %436 = vmatprep.subr.mxu0 %v258
    %437 = vmatpush1.msra.mxu0 %v257
    %438 = vmatprep.subr.mxu0 %v262
    %439 = vmatpush1.msra.mxu0 %v261
    %440 = vmatprep.subr.mxu0 %v266
    %441 = vmatpush1.msra.mxu0 %v265
    %442 = vmatprep.subr.mxu0 %v270
    %443 = vmatpush1.msra.mxu0 %v269
    %444 = vmatprep.subr.mxu0 %v274
    %445 = vmatpush1.msra.mxu0 %v273
    %446 = vmatprep.subr.mxu0 %v278
    %447 = vmatpush1.msra.mxu0 %v277
    %448 = vmatprep.subr.mxu0 %v282
    %449 = vmatpush1.msra.mxu0 %v281
    %450 = vmatprep.subr.mxu0 %v286
    %451 = vmatpush1.msra.mxu0 %v285
    %452 = vmatprep.subr.mxu0 %v290
    %453 = vmatpush1.msra.mxu0 %v289
    %454 = vmatprep.subr.mxu0 %v294
    %455 = vmatpush1.msra.mxu0 %v293
    %456 = vmatprep.subr.mxu0 %v298
    %457 = vmatpush1.msra.mxu0 %v297
    %458 = vmatprep.mubr.f32.mxu0 %v44
    %459 = vmatmul.mubr.f32.gmra.mrb[0].mxu0 %v43
    %v460 = vpop.f32.mrb[0].mxu0
    %v461 = vadd.f32 %v390, %v460
    %v462 = vpop.f32.mrb[0].mxu0
    %v463 = vadd.f32 %v392, %v462
    %464 = vdwg.mxu0
    %465 = vmatprep.subr.mxu0 %v48
    %466 = vmatpush1.msra.mxu0 %v47
    %467 = vmatprep.subr.mxu0 %v52
    %468 = vmatpush1.msra.mxu0 %v51
    %469 = vmatprep.subr.mxu0 %v56
    %470 = vmatpush1.msra.mxu0 %v55
    %471 = vmatprep.subr.mxu0 %v60
    %472 = vmatpush1.msra.mxu0 %v59
    %473 = vmatprep.subr.mxu0 %v64
    %474 = vmatpush1.msra.mxu0 %v63
    %475 = vmatprep.subr.mxu0 %v68
    %476 = vmatpush1.msra.mxu0 %v67
    %477 = vmatprep.subr.mxu0 %v72
    %478 = vmatpush1.msra.mxu0 %v71
    %479 = vmatprep.subr.mxu0 %v76
    %480 = vmatpush1.msra.mxu0 %v75
    %481 = vmatprep.subr.mxu0 %v80
    %482 = vmatpush1.msra.mxu0 %v79
    %483 = vmatprep.subr.mxu0 %v84
    %484 = vmatpush1.msra.mxu0 %v83
    %485 = vmatprep.subr.mxu0 %v88
    %486 = vmatpush1.msra.mxu0 %v87
    %487 = vmatprep.subr.mxu0 %v92
    %488 = vmatpush1.msra.mxu0 %v91
    %489 = vmatprep.subr.mxu0 %v96
    %490 = vmatpush1.msra.mxu0 %v95
    %491 = vmatprep.subr.mxu0 %v100
    %492 = vmatpush1.msra.mxu0 %v99
    %493 = vmatprep.subr.mxu0 %v104
    %494 = vmatpush1.msra.mxu0 %v103
    %495 = vmatprep.subr.mxu0 %v108
    %496 = vmatpush1.msra.mxu0 %v107
    %497 = vmatprep.subr.mxu0 %v112
    %498 = vmatpush1.msra.mxu0 %v111
    %499 = vmatprep.subr.mxu0 %v116
    %500 = vmatpush1.msra.mxu0 %v115
    %501 = vmatprep.subr.mxu0 %v120
    %502 = vmatpush1.msra.mxu0 %v119
    %503 = vmatprep.subr.mxu0 %v124
    %504 = vmatpush1.msra.mxu0 %v123
    %505 = vmatprep.subr.mxu0 %v128
    %506 = vmatpush1.msra.mxu0 %v127
    %507 = vmatprep.subr.mxu0 %v132
    %508 = vmatpush1.msra.mxu0 %v131
    %509 = vmatprep.subr.mxu0 %v136
    %510 = vmatpush1.msra.mxu0 %v135
    %511 = vmatprep.subr.mxu0 %v140
    %512 = vmatpush1.msra.mxu0 %v139
    %513 = vmatprep.subr.mxu0 %v144
    %514 = vmatpush1.msra.mxu0 %v143
    %515 = vmatprep.subr.mxu0 %v148
    %516 = vmatpush1.msra.mxu0 %v147
    %517 = vmatprep.subr.mxu0 %v152
    %518 = vmatpush1.msra.mxu0 %v151
    %519 = vmatprep.subr.mxu0 %v156
    %520 = vmatpush1.msra.mxu0 %v155
    %521 = vmatprep.subr.mxu0 %v160
    %522 = vmatpush1.msra.mxu0 %v159
    %523 = vmatprep.subr.mxu0 %v164
    %524 = vmatpush1.msra.mxu0 %v163
    %525 = vmatprep.subr.mxu0 %v168
    %526 = vmatpush1.msra.mxu0 %v167
    %527 = vmatprep.subr.mxu0 %v172
    %528 = vmatpush1.msra.mxu0 %v171
    %529 = vmatprep.mubr.f32.mxu0 %v42
    %530 = vmatmul.mubr.f32.gmra.mrb[0].mxu0 %v41
    %v531 = vpop.f32.mrb[0].mxu0
    %v532 = vadd.f32 %v314, %v531
    %v533 = vpop.f32.mrb[0].mxu0
    %v534 = vadd.f32 %v318, %v533
    %535 = vdwg.mxu0
    %536 = vmatprep.subr.mxu0 %v176
    %537 = vmatpush1.msra.mxu0 %v175
    %538 = vmatprep.subr.mxu0 %v180
    %539 = vmatpush1.msra.mxu0 %v179
    %540 = vmatprep.subr.mxu0 %v184
    %541 = vmatpush1.msra.mxu0 %v183
    %542 = vmatprep.subr.mxu0 %v188
    %543 = vmatpush1.msra.mxu0 %v187
    %544 = vmatprep.subr.mxu0 %v192
    %545 = vmatpush1.msra.mxu0 %v191
    %546 = vmatprep.subr.mxu0 %v196
    %547 = vmatpush1.msra.mxu0 %v195
    %548 = vmatprep.subr.mxu0 %v200
    %549 = vmatpush1.msra.mxu0 %v199
    %550 = vmatprep.subr.mxu0 %v204
    %551 = vmatpush1.msra.mxu0 %v203
    %552 = vmatprep.subr.mxu0 %v208
    %553 = vmatpush1.msra.mxu0 %v207
    %554 = vmatprep.subr.mxu0 %v212
    %555 = vmatpush1.msra.mxu0 %v211
    %556 = vmatprep.subr.mxu0 %v216
    %557 = vmatpush1.msra.mxu0 %v215
    %558 = vmatprep.subr.mxu0 %v220
    %559 = vmatpush1.msra.mxu0 %v219
    %560 = vmatprep.subr.mxu0 %v224
    %561 = vmatpush1.msra.mxu0 %v223
    %562 = vmatprep.subr.mxu0 %v228
    %563 = vmatpush1.msra.mxu0 %v227
    %564 = vmatprep.subr.mxu0 %v232
    %565 = vmatpush1.msra.mxu0 %v231
    %566 = vmatprep.subr.mxu0 %v236
    %567 = vmatpush1.msra.mxu0 %v235
    %568 = vmatprep.subr.mxu0 %v240
    %569 = vmatpush1.msra.mxu0 %v239
    %570 = vmatprep.subr.mxu0 %v244
    %571 = vmatpush1.msra.mxu0 %v243
    %572 = vmatprep.subr.mxu0 %v248
    %573 = vmatpush1.msra.mxu0 %v247
    %574 = vmatprep.subr.mxu0 %v252
    %575 = vmatpush1.msra.mxu0 %v251
    %576 = vmatprep.subr.mxu0 %v256
    %577 = vmatpush1.msra.mxu0 %v255
    %578 = vmatprep.subr.mxu0 %v260
    %579 = vmatpush1.msra.mxu0 %v259
    %580 = vmatprep.subr.mxu0 %v264
    %581 = vmatpush1.msra.mxu0 %v263
    %582 = vmatprep.subr.mxu0 %v268
    %583 = vmatpush1.msra.mxu0 %v267
    %584 = vmatprep.subr.mxu0 %v272
    %585 = vmatpush1.msra.mxu0 %v271
    %586 = vmatprep.subr.mxu0 %v276
    %587 = vmatpush1.msra.mxu0 %v275
    %588 = vmatprep.subr.mxu0 %v280
    %589 = vmatpush1.msra.mxu0 %v279
    %590 = vmatprep.subr.mxu0 %v284
    %591 = vmatpush1.msra.mxu0 %v283
    %592 = vmatprep.subr.mxu0 %v288
    %593 = vmatpush1.msra.mxu0 %v287
    %594 = vmatprep.subr.mxu0 %v292
    %595 = vmatpush1.msra.mxu0 %v291
    %596 = vmatprep.subr.mxu0 %v296
    %597 = vmatpush1.msra.mxu0 %v295
    %598 = vmatprep.subr.mxu0 %v300
    %599 = vmatpush1.msra.mxu0 %v299
    %600 = vmatprep.mubr.f32.mxu0 %v44
    %601 = vmatmul.mubr.f32.gmra.mrb[0].mxu0 %v43
    %v602 = vpop.f32.mrb[0].mxu0
    %v603 = vadd.f32 %v532, %v602
    %v604 = vpop.f32.mrb[0].mxu0
    %v605 = vadd.f32 %v534, %v604
    %606 = vdwg.mxu0
    %607 = vst [vmem:[#allocation7] sm:$0xff] %v461
    %608 = vst [vmem:[#allocation7 + $0x8] sm:$0xff] %v463
    %609 = vst [vmem:[#allocation7 + $0x10] sm:$0xff] %v603
    %610 = vst [vmem:[#allocation7 + $0x18] sm:$0xff] %v605
    // Predicated region
    $region22: #{tpu_custom_call.1} parent=1 // pred_check
      _
    $region23: #{tpu_custom_call.1} parent=1 // pred_check_branch
      %612 = sbr.rel (0) target = $region25
    $region24: #{tpu_custom_call.1} parent=1 // pred_region
      %s614 = ssub.s32 512, 512
      %615 = vsyncadd [#allocation4], %s614
      %s617 = sshll.u32 [#allocation7], 4
      %s618 = int_to_ptr.vmem [resolvable:$true] %s617
      %620 = dma.vmem_to_hbm [thread:$0]  %s618, 512, %s3, [#allocation4]
    $region25: #{tpu_custom_call.1} parent=1 // pred_fallthru
      _
    // Predicated region
    $region26: #{tpu_custom_call.1} parent=1 // pred_check
      _
    $region27: #{tpu_custom_call.1} parent=1 // pred_check_branch
      %622 = sbr.rel (0) target = $region29
    $region28: #{tpu_custom_call.1} parent=1 // pred_region
      %623 = dma.done [#allocation4], 512
    $region29: #{tpu_custom_call.1} parent=1 // pred_fallthru
      _
    %624 = vsyncpa [#allocation3], 1
    %625 = vsyncpa [#allocation6], 1
    %626 = vsyncpa [#allocation4], 1

</llo_original>
